<compile_context>
chip_gen: v6e
topology: v6e:2x2x1
jax: 0.10.0
libtpu: 0.0.40
codegen_flags: <defaults>
</compile_context>

<pallas_src>
import functools

import jax
import jax.numpy as jnp
from jax.experimental import pallas as pl
from jax.experimental.pallas import tpu as pltpu


_VMEM = pl.BlockSpec(memory_space=pltpu.MemorySpace.VMEM)


def _round_up(x, m):
    return (x + m - 1) // m * m


# ----------------------------- Pallas kernels ------------------------------ #


def _maxpool2x2_kernel(x_ref, o_ref):
    # x_ref: (B, Hh, 2, Wh, 2*C)  -- a free reshape of the NHWC input.
    # o_ref: (B, Hh, Wh, C)
    c = o_ref.shape[-1]
    x = x_ref[...]
    hm = jnp.maximum(x[:, :, 0], x[:, :, 1])             # max over the H pair
    o_ref[...] = jnp.maximum(hm[..., :c], hm[..., c:])   # max over the W pair


def _res_block_kernel(x_ref, w1_ref, w2_ref, w3_ref,
                      g1_ref, b1_ref, g2_ref, b2_ref,
                      mask_ref, o_ref, *, shifts, inv_m):
    """Fused SparseResBlock on (Cpad, Mpad) channel-major flattened features."""
    mask = mask_ref[...]                     # (1, Mpad): 1.0 at valid sites

    def conv3x3(act, w_ref):
        # 9 shifted views along the flattened padded site axis -> one fat matmul.
        n = act.shape[-1]
        slabs = [act if d == 0 else pltpu.roll(act, (-d) % n, 1)
                 for d in shifts]
        patch = jnp.concatenate(slabs, axis=0).astype(jnp.bfloat16)
        # (Cpad, 9*Cpad) @ (9*Cpad, Mpad) -> (Cpad, Mpad), f32 accumulate on MXU.
        return jnp.dot(w_ref[...], patch, preferred_element_type=jnp.float32)

    def normalize(acc, eps):
        # Single-pass masked per-channel statistics over all valid sites.
        s1 = jnp.sum(acc * mask, axis=1, keepdims=True)
        s2 = jnp.sum(acc * acc * mask, axis=1, keepdims=True)
        mean = s1 * inv_m
        var = jnp.maximum(s2 * inv_m - mean * mean, 0.0)   # biased variance
        return (acc - mean) * jax.lax.rsqrt(var + eps)

    def lrelu(y, slope):
        return jnp.where(y >= 0.0, y, slope * y)

    x = x_ref[...]
    # conv_block1: SubmanifoldConv3x3 + BatchNorm1d(eps=1e-4) + LeakyReLU(0.333)
    h1 = normalize(conv3x3(x, w1_ref), 1e-4) * g1_ref[...] + b1_ref[...]
    h1 = lrelu(h1, 0.333) * mask            # mask re-zeroes the halo sites
    # conv_block2
    h2 = normalize(conv3x3(h1, w2_ref), 1e-4) * g2_ref[...] + b2_ref[...]
    h2 = lrelu(h2, 0.333) * mask
    # conv_block3 + InstanceNorm1d(eps=1e-5, no affine) + residual + LeakyReLU(0.01)
    h3 = normalize(conv3x3(h2, w3_ref), 1e-5) + h1
    o_ref[...] = lrelu(h3, 0.01) * mask


# ------------------------------- JAX glue ---------------------------------- #


def _prep_weight(w, cpad):
    # (9, cin, cout) -> (cpad, 9*cpad) bf16; entry [co, k*cpad + ci] = w[k, ci, co].
    _, cin, cout = w.shape
    wt = jnp.transpose(w, (2, 0, 1))                        # (cout, 9, cin)
    wt = jnp.pad(wt, ((0, cpad - cout), (0, 0), (0, cpad - cin)))
    return wt.reshape(cpad, 9 * cpad).astype(jnp.bfloat16)


def _prep_affine(v, cpad):
    return jnp.pad(v, (0, cpad - v.shape[0])).reshape(cpad, 1).astype(jnp.float32)


def unet_encoder_block(x_nchw, params, *, is_pooling):
    """Forward of UNetEncoderBlock.  x_nchw: (B, num_in, H, W) float32."""
    B, cin, H, W = x_nchw.shape
    cout = params["w1"].shape[-1]

    if is_pooling:  # scn.MaxPooling(2, 2, 2): 2x2 / stride 2
        Hh, Wh = H // 2, W // 2
        xr = jnp.transpose(x_nchw, (0, 2, 3, 1)).reshape(B, Hh, 2, Wh, 2 * cin)
        pooled = pl.pallas_call(
            _maxpool2x2_kernel,
            out_shape=jax.ShapeDtypeStruct((B, Hh, Wh, cin), x_nchw.dtype),
            in_specs=[_VMEM],
            out_specs=_VMEM,
        )(xr)
        xcm = jnp.transpose(pooled, (3, 0, 1, 2))           # (cin, B, Hh, Wh)
        H, W = Hh, Wh
    else:
        xcm = jnp.transpose(x_nchw, (1, 0, 2, 3))           # (cin, B, H, W)

    cpad = _round_up(max(cin, cout), 8)
    Hp, Wp = H + 2, W + 2
    msites = B * Hp * Wp
    mpad = _round_up(msites, 128)

    # channel pad + spatial zero-pad (conv halo) + flatten sites + lane pad
    xcm = jnp.pad(xcm, ((0, cpad - cin), (0, 0), (1, 1), (1, 1)))
    xflat = jnp.pad(xcm.reshape(cpad, msites).astype(jnp.float32),
                    ((0, 0), (0, mpad - msites)))

    # validity mask: 1 at real sites, 0 at halo / lane padding
    mask = jnp.pad(jnp.ones((B, H, W), jnp.float32), ((0, 0), (1, 1), (1, 1)))
    mask = jnp.pad(mask.reshape(1, msites), ((0, 0), (0, mpad - msites)))

    w1 = _prep_weight(params["w1"], cpad)
    w2 = _prep_weight(params["w2"], cpad)
    w3 = _prep_weight(params["w3"], cpad)
    g1 = _prep_affine(params["g1"], cpad)
    b1 = _prep_affine(params["b1"], cpad)
    g2 = _prep_affine(params["g2"], cpad)
    b2 = _prep_affine(params["b2"], cpad)

    # 3x3 tap offsets along the flattened (B, Hp, Wp) padded site axis
    shifts = tuple((dy - 1) * Wp + (dx - 1) for dy in range(3) for dx in range(3))
    inv_m = 1.0 / float(B * H * W)

    flops = 3 * 2 * cpad * (9 * cpad) * mpad
    bytes_accessed = (2 * 4 * cpad * mpad            # activations in + out
                      + 3 * 2 * cpad * 9 * cpad      # bf16 weights
                      + 4 * mpad + 4 * 4 * cpad)     # mask + affine params

    out = pl.pallas_call(
        functools.partial(_res_block_kernel, shifts=shifts, inv_m=inv_m),
        out_shape=jax.ShapeDtypeStruct((cpad, mpad), jnp.float32),
        in_specs=[_VMEM] * 9,
        out_specs=_VMEM,
        compiler_params=pltpu.CompilerParams(vmem_limit_bytes=32 * 1024 * 1024),
        cost_estimate=pl.CostEstimate(flops=flops, transcendentals=3 * cpad,
                                      bytes_accessed=bytes_accessed),
    )(xflat, w1, w2, w3, g1, b1, g2, b2, mask)

    out = out[:cout, :msites].reshape(cout, B, Hp, Wp)[:, :, 1:H + 1, 1:W + 1]
    return jnp.transpose(out, (1, 0, 2, 3))                 # -> NCHW


# --------------------------- deterministic params --------------------------- #


def init_params(key, num_in, num_out):
    ks = jax.random.split(key, 7)

    def conv_w(k, cin, cout):
        std = (2.0 / (9 * cin)) ** 0.5
        return std * jax.random.normal(k, (9, cin, cout), jnp.float32)

    return {
        "w1": conv_w(ks[0], num_in, num_out),
        "g1": 1.0 + 0.1 * jax.random.normal(ks[1], (num_out,), jnp.float32),
        "b1": 0.1 * jax.random.normal(ks[2], (num_out,), jnp.float32),
        "w2": conv_w(ks[3], num_out, num_out),
        "g2": 1.0 + 0.1 * jax.random.normal(ks[4], (num_out,), jnp.float32),
        "b2": 0.1 * jax.random.normal(ks[5], (num_out,), jnp.float32),
        "w3": conv_w(ks[6], num_out, num_out),
    }


if __name__ == "__main__":
    key = jax.random.PRNGKey(0)
    kx, kp = jax.random.split(key)

    B, num_in, H, W = 2, 4, 16, 16
    num_out = 8
    is_pooling = True

    x = jax.random.normal(kx, (B, num_in, H, W), jnp.float32)
    params = init_params(kp, num_in, num_out)

    fwd = jax.jit(functools.partial(unet_encoder_block, is_pooling=is_pooling))
    out = jax.block_until_ready(fwd(x, params))

    expected_hw = (H // 2, W // 2) if is_pooling else (H, W)
    assert out.shape == (B, num_out) + expected_hw, out.shape
    assert bool(jnp.all(jnp.isfinite(out)))
    print("KERNEL_OK")
</pallas_src>

<mosaic_0001>
module attributes {stable_mosaic.version = 11 : i64} {
  func.func @_maxpool2x2_kernel(%arg0: memref<2x8x2x8x8xf32, #tpu.memory_space<vmem>>, %arg1: memref<2x8x8x4xf32, #tpu.memory_space<vmem>>) attributes {dimension_semantics = [], scalar_prefetch = 0 : i64, scratch_operands = 0 : i64, tpu.core_type = #tpu.core_type<tc>} {
    %c0 = arith.constant 0 : index
    %c0_0 = arith.constant 0 : index
    %c0_1 = arith.constant 0 : index
    %c0_2 = arith.constant 0 : index
    %c0_3 = arith.constant 0 : index
    %0 = vector.load %arg0[%c0, %c0_0, %c0_1, %c0_2, %c0_3] : memref<2x8x2x8x8xf32, #tpu.memory_space<vmem>>, vector<2x8x2x8x8xf32>
    %1 = vector.extract_strided_slice %0 {offsets = [0, 0, 0, 0, 0], sizes = [2, 8, 1, 8, 8], strides = [1, 1, 1, 1, 1]} : vector<2x8x2x8x8xf32> to vector<2x8x1x8x8xf32>
    %2 = vector.shape_cast %1 : vector<2x8x1x8x8xf32> to vector<2x8x8x8xf32>
    %3 = vector.extract_strided_slice %0 {offsets = [0, 0, 1, 0, 0], sizes = [2, 8, 1, 8, 8], strides = [1, 1, 1, 1, 1]} : vector<2x8x2x8x8xf32> to vector<2x8x1x8x8xf32>
    %4 = vector.shape_cast %3 : vector<2x8x1x8x8xf32> to vector<2x8x8x8xf32>
    %5 = arith.maximumf %2, %4 : vector<2x8x8x8xf32>
    %6 = vector.extract_strided_slice %5 {offsets = [0, 0, 0, 0], sizes = [2, 8, 8, 4], strides = [1, 1, 1, 1]} : vector<2x8x8x8xf32> to vector<2x8x8x4xf32>
    %7 = vector.extract_strided_slice %5 {offsets = [0, 0, 0, 4], sizes = [2, 8, 8, 4], strides = [1, 1, 1, 1]} : vector<2x8x8x8xf32> to vector<2x8x8x4xf32>
    %8 = arith.maximumf %6, %7 : vector<2x8x8x4xf32>
    %c0_4 = arith.constant 0 : index
    %c0_5 = arith.constant 0 : index
    %c0_6 = arith.constant 0 : index
    %c0_7 = arith.constant 0 : index
    %9 = vector.load %arg1[%c0_4, %c0_5, %c0_6, %c0_7] : memref<2x8x8x4xf32, #tpu.memory_space<vmem>>, vector<2x8x8x4xf32>
    tpu.vector_store %arg1[%c0_4, %c0_5, %c0_6, %c0_7], %8 {strides = array<i32>} : memref<2x8x8x4xf32, #tpu.memory_space<vmem>>, vector<2x8x8x4xf32>,
    return
  }
}

module attributes {stable_mosaic.version = 11 : i64} {
  func.func @_res_block_kernel(%arg0: memref<8x256xf32, #tpu.memory_space<vmem>>, %arg1: memref<8x72xbf16, #tpu.memory_space<vmem>>, %arg2: memref<8x72xbf16, #tpu.memory_space<vmem>>, %arg3: memref<8x72xbf16, #tpu.memory_space<vmem>>, %arg4: memref<8x1xf32, #tpu.memory_space<vmem>>, %arg5: memref<8x1xf32, #tpu.memory_space<vmem>>, %arg6: memref<8x1xf32, #tpu.memory_space<vmem>>, %arg7: memref<8x1xf32, #tpu.memory_space<vmem>>, %arg8: memref<1x256xf32, #tpu.memory_space<vmem>>, %arg9: memref<8x256xf32, #tpu.memory_space<vmem>>) attributes {dimension_semantics = [], scalar_prefetch = 0 : i64, scratch_operands = 0 : i64, tpu.core_type = #tpu.core_type<tc>} {
    %c0 = arith.constant 0 : index
    %c0_0 = arith.constant 0 : index
    %0 = vector.load %arg8[%c0, %c0_0] : memref<1x256xf32, #tpu.memory_space<vmem>>, vector<1x256xf32>
    %c0_1 = arith.constant 0 : index
    %c0_2 = arith.constant 0 : index
    %1 = vector.load %arg0[%c0_1, %c0_2] : memref<8x256xf32, #tpu.memory_space<vmem>>, vector<8x256xf32>
    %c11_i32 = arith.constant 11 : i32
    %2 = tpu.dynamic_rotate %1 by %c11_i32 dim 1 : vector<8x256xf32>, i32 -> vector<8x256xf32>
    %c10_i32 = arith.constant 10 : i32
    %3 = tpu.dynamic_rotate %1 by %c10_i32 dim 1 : vector<8x256xf32>, i32 -> vector<8x256xf32>
    %c9_i32 = arith.constant 9 : i32
    %4 = tpu.dynamic_rotate %1 by %c9_i32 dim 1 : vector<8x256xf32>, i32 -> vector<8x256xf32>
    %c1_i32 = arith.constant 1 : i32
    %5 = tpu.dynamic_rotate %1 by %c1_i32 dim 1 : vector<8x256xf32>, i32 -> vector<8x256xf32>
    %c255_i32 = arith.constant 255 : i32
    %6 = tpu.dynamic_rotate %1 by %c255_i32 dim 1 : vector<8x256xf32>, i32 -> vector<8x256xf32>
    %c247_i32 = arith.constant 247 : i32
    %7 = tpu.dynamic_rotate %1 by %c247_i32 dim 1 : vector<8x256xf32>, i32 -> vector<8x256xf32>
    %c246_i32 = arith.constant 246 : i32
    %8 = tpu.dynamic_rotate %1 by %c246_i32 dim 1 : vector<8x256xf32>, i32 -> vector<8x256xf32>
    %c245_i32 = arith.constant 245 : i32
    %9 = tpu.dynamic_rotate %1 by %c245_i32 dim 1 : vector<8x256xf32>, i32 -> vector<8x256xf32>
    %10 = tpu.concatenate %2, %3, %4, %5, %1, %6, %7, %8, %9 in 0 : vector<8x256xf32>, vector<8x256xf32>, vector<8x256xf32>, vector<8x256xf32>, vector<8x256xf32>, vector<8x256xf32>, vector<8x256xf32>, vector<8x256xf32>, vector<8x256xf32> -> vector<72x256xf32>
    %11 = arith.truncf %10 : vector<72x256xf32> to vector<72x256xbf16>
    %c0_3 = arith.constant 0 : index
    %c0_4 = arith.constant 0 : index
    %12 = vector.load %arg1[%c0_3, %c0_4] : memref<8x72xbf16, #tpu.memory_space<vmem>>, vector<8x72xbf16>
    %cst = arith.constant dense<0.000000e+00> : vector<8x256xf32>
    %13 = tpu.matmul %12, %11, %cst {dimension_numbers = #tpu.dot_dimension_numbers<[1], [0], [0], [1], [0, 0, 1, 1], [], []>} : vector<8x72xbf16>, vector<72x256xbf16>, vector<8x256xf32> -> vector<8x256xf32>
    %14 = vector.broadcast %0 : vector<1x256xf32> to vector<8x256xf32>
    %15 = arith.mulf %13, %14 : vector<8x256xf32>
    %cst_5 = arith.constant dense<0.000000e+00> : vector<8xf32>
    %16 = vector.multi_reduction <add>, %15, %cst_5 [1] : vector<8x256xf32> to vector<8xf32>
    %17 = vector.shape_cast %16 : vector<8xf32> to vector<8x1xf32>
    %18 = arith.mulf %13, %13 : vector<8x256xf32>
    %19 = vector.broadcast %0 : vector<1x256xf32> to vector<8x256xf32>
    %20 = arith.mulf %18, %19 : vector<8x256xf32>
    %cst_6 = arith.constant dense<0.000000e+00> : vector<8xf32>
    %21 = vector.multi_reduction <add>, %20, %cst_6 [1] : vector<8x256xf32> to vector<8xf32>
    %22 = vector.shape_cast %21 : vector<8xf32> to vector<8x1xf32>
    %cst_7 = arith.constant 7.812500e-03 : f32
    %23 = vector.broadcast %cst_7 : f32 to vector<8x1xf32>
    %24 = arith.mulf %17, %23 : vector<8x1xf32>
    %cst_8 = arith.constant 7.812500e-03 : f32
    %25 = vector.broadcast %cst_8 : f32 to vector<8x1xf32>
    %26 = arith.mulf %22, %25 : vector<8x1xf32>
    %27 = arith.mulf %24, %24 : vector<8x1xf32>
    %28 = arith.subf %26, %27 : vector<8x1xf32>
    %cst_9 = arith.constant 0.000000e+00 : f32
    %29 = vector.broadcast %cst_9 : f32 to vector<8x1xf32>
    %30 = arith.maximumf %28, %29 : vector<8x1xf32>
    %31 = vector.broadcast %24 : vector<8x1xf32> to vector<8x256xf32>
    %32 = arith.subf %13, %31 : vector<8x256xf32>
    %cst_10 = arith.constant 9.99999974E-5 : f32
    %33 = vector.broadcast %cst_10 : f32 to vector<8x1xf32>
    %34 = arith.addf %30, %33 : vector<8x1xf32>
    %35 = math.rsqrt %34 : vector<8x1xf32>
    %36 = vector.broadcast %35 : vector<8x1xf32> to vector<8x256xf32>
    %37 = arith.mulf %32, %36 : vector<8x256xf32>
    %c0_11 = arith.constant 0 : index
    %c0_12 = arith.constant 0 : index
    %38 = vector.load %arg4[%c0_11, %c0_12] : memref<8x1xf32, #tpu.memory_space<vmem>>, vector<8x1xf32>
    %39 = vector.broadcast %38 : vector<8x1xf32> to vector<8x256xf32>
    %40 = arith.mulf %37, %39 : vector<8x256xf32>
    %c0_13 = arith.constant 0 : index
    %c0_14 = arith.constant 0 : index
    %41 = vector.load %arg5[%c0_13, %c0_14] : memref<8x1xf32, #tpu.memory_space<vmem>>, vector<8x1xf32>
    %42 = vector.broadcast %41 : vector<8x1xf32> to vector<8x256xf32>
    %43 = arith.addf %40, %42 : vector<8x256xf32>
    %cst_15 = arith.constant 0.000000e+00 : f32
    %44 = vector.broadcast %cst_15 : f32 to vector<8x256xf32>
    %45 = arith.cmpf oge, %43, %44 : vector<8x256xf32>
    %cst_16 = arith.constant 3.330000e-01 : f32
    %46 = vector.broadcast %cst_16 : f32 to vector<8x256xf32>
    %47 = arith.mulf %46, %43 : vector<8x256xf32>
    %48 = arith.select %45, %43, %47 : vector<8x256xi1>, vector<8x256xf32>
    %49 = vector.broadcast %0 : vector<1x256xf32> to vector<8x256xf32>
    %50 = arith.mulf %48, %49 : vector<8x256xf32>
    %c11_i32_17 = arith.constant 11 : i32
    %51 = tpu.dynamic_rotate %50 by %c11_i32_17 dim 1 : vector<8x256xf32>, i32 -> vector<8x256xf32>
    %c10_i32_18 = arith.constant 10 : i32
    %52 = tpu.dynamic_rotate %50 by %c10_i32_18 dim 1 : vector<8x256xf32>, i32 -> vector<8x256xf32>
    %c9_i32_19 = arith.constant 9 : i32
    %53 = tpu.dynamic_rotate %50 by %c9_i32_19 dim 1 : vector<8x256xf32>, i32 -> vector<8x256xf32>
    %c1_i32_20 = arith.constant 1 : i32
    %54 = tpu.dynamic_rotate %50 by %c1_i32_20 dim 1 : vector<8x256xf32>, i32 -> vector<8x256xf32>
    %c255_i32_21 = arith.constant 255 : i32
    %55 = tpu.dynamic_rotate %50 by %c255_i32_21 dim 1 : vector<8x256xf32>, i32 -> vector<8x256xf32>
    %c247_i32_22 = arith.constant 247 : i32
    %56 = tpu.dynamic_rotate %50 by %c247_i32_22 dim 1 : vector<8x256xf32>, i32 -> vector<8x256xf32>
    %c246_i32_23 = arith.constant 246 : i32
    %57 = tpu.dynamic_rotate %50 by %c246_i32_23 dim 1 : vector<8x256xf32>, i32 -> vector<8x256xf32>
    %c245_i32_24 = arith.constant 245 : i32
    %58 = tpu.dynamic_rotate %50 by %c245_i32_24 dim 1 : vector<8x256xf32>, i32 -> vector<8x256xf32>
    %59 = tpu.concatenate %51, %52, %53, %54, %50, %55, %56, %57, %58 in 0 : vector<8x256xf32>, vector<8x256xf32>, vector<8x256xf32>, vector<8x256xf32>, vector<8x256xf32>, vector<8x256xf32>, vector<8x256xf32>, vector<8x256xf32>, vector<8x256xf32> -> vector<72x256xf32>
    %60 = arith.truncf %59 : vector<72x256xf32> to vector<72x256xbf16>
    %c0_25 = arith.constant 0 : index
    %c0_26 = arith.constant 0 : index
    %61 = vector.load %arg2[%c0_25, %c0_26] : memref<8x72xbf16, #tpu.memory_space<vmem>>, vector<8x72xbf16>
    %cst_27 = arith.constant dense<0.000000e+00> : vector<8x256xf32>
    %62 = tpu.matmul %61, %60, %cst_27 {dimension_numbers = #tpu.dot_dimension_numbers<[1], [0], [0], [1], [0, 0, 1, 1], [], []>} : vector<8x72xbf16>, vector<72x256xbf16>, vector<8x256xf32> -> vector<8x256xf32>
    %63 = vector.broadcast %0 : vector<1x256xf32> to vector<8x256xf32>
    %64 = arith.mulf %62, %63 : vector<8x256xf32>
    %cst_28 = arith.constant dense<0.000000e+00> : vector<8xf32>
    %65 = vector.multi_reduction <add>, %64, %cst_28 [1] : vector<8x256xf32> to vector<8xf32>
    %66 = vector.shape_cast %65 : vector<8xf32> to vector<8x1xf32>
    %67 = arith.mulf %62, %62 : vector<8x256xf32>
    %68 = vector.broadcast %0 : vector<1x256xf32> to vector<8x256xf32>
    %69 = arith.mulf %67, %68 : vector<8x256xf32>
    %cst_29 = arith.constant dense<0.000000e+00> : vector<8xf32>
    %70 = vector.multi_reduction <add>, %69, %cst_29 [1] : vector<8x256xf32> to vector<8xf32>
    %71 = vector.shape_cast %70 : vector<8xf32> to vector<8x1xf32>
    %cst_30 = arith.constant 7.812500e-03 : f32
    %72 = vector.broadcast %cst_30 : f32 to vector<8x1xf32>
    %73 = arith.mulf %66, %72 : vector<8x1xf32>
    %cst_31 = arith.constant 7.812500e-03 : f32
    %74 = vector.broadcast %cst_31 : f32 to vector<8x1xf32>
    %75 = arith.mulf %71, %74 : vector<8x1xf32>
    %76 = arith.mulf %73, %73 : vector<8x1xf32>
    %77 = arith.subf %75, %76 : vector<8x1xf32>
    %cst_32 = arith.constant 0.000000e+00 : f32
    %78 = vector.broadcast %cst_32 : f32 to vector<8x1xf32>
    %79 = arith.maximumf %77, %78 : vector<8x1xf32>
    %80 = vector.broadcast %73 : vector<8x1xf32> to vector<8x256xf32>
    %81 = arith.subf %62, %80 : vector<8x256xf32>
    %cst_33 = arith.constant 9.99999974E-5 : f32
    %82 = vector.broadcast %cst_33 : f32 to vector<8x1xf32>
    %83 = arith.addf %79, %82 : vector<8x1xf32>
    %84 = math.rsqrt %83 : vector<8x1xf32>
    %85 = vector.broadcast %84 : vector<8x1xf32> to vector<8x256xf32>
    %86 = arith.mulf %81, %85 : vector<8x256xf32>
    %c0_34 = arith.constant 0 : index
    %c0_35 = arith.constant 0 : index
    %87 = vector.load %arg6[%c0_34, %c0_35] : memref<8x1xf32, #tpu.memory_space<vmem>>, vector<8x1xf32>
    %88 = vector.broadcast %87 : vector<8x1xf32> to vector<8x256xf32>
    %89 = arith.mulf %86, %88 : vector<8x256xf32>
    %c0_36 = arith.constant 0 : index
    %c0_37 = arith.constant 0 : index
    %90 = vector.load %arg7[%c0_36, %c0_37] : memref<8x1xf32, #tpu.memory_space<vmem>>, vector<8x1xf32>
    %91 = vector.broadcast %90 : vector<8x1xf32> to vector<8x256xf32>
    %92 = arith.addf %89, %91 : vector<8x256xf32>
    %cst_38 = arith.constant 0.000000e+00 : f32
    %93 = vector.broadcast %cst_38 : f32 to vector<8x256xf32>
    %94 = arith.cmpf oge, %92, %93 : vector<8x256xf32>
    %cst_39 = arith.constant 3.330000e-01 : f32
    %95 = vector.broadcast %cst_39 : f32 to vector<8x256xf32>
    %96 = arith.mulf %95, %92 : vector<8x256xf32>
    %97 = arith.select %94, %92, %96 : vector<8x256xi1>, vector<8x256xf32>
    %98 = vector.broadcast %0 : vector<1x256xf32> to vector<8x256xf32>
    %99 = arith.mulf %97, %98 : vector<8x256xf32>
    %c11_i32_40 = arith.constant 11 : i32
    %100 = tpu.dynamic_rotate %99 by %c11_i32_40 dim 1 : vector<8x256xf32>, i32 -> vector<8x256xf32>
    %c10_i32_41 = arith.constant 10 : i32
    %101 = tpu.dynamic_rotate %99 by %c10_i32_41 dim 1 : vector<8x256xf32>, i32 -> vector<8x256xf32>
    %c9_i32_42 = arith.constant 9 : i32
    %102 = tpu.dynamic_rotate %99 by %c9_i32_42 dim 1 : vector<8x256xf32>, i32 -> vector<8x256xf32>
    %c1_i32_43 = arith.constant 1 : i32
    %103 = tpu.dynamic_rotate %99 by %c1_i32_43 dim 1 : vector<8x256xf32>, i32 -> vector<8x256xf32>
    %c255_i32_44 = arith.constant 255 : i32
    %104 = tpu.dynamic_rotate %99 by %c255_i32_44 dim 1 : vector<8x256xf32>, i32 -> vector<8x256xf32>
    %c247_i32_45 = arith.constant 247 : i32
    %105 = tpu.dynamic_rotate %99 by %c247_i32_45 dim 1 : vector<8x256xf32>, i32 -> vector<8x256xf32>
    %c246_i32_46 = arith.constant 246 : i32
    %106 = tpu.dynamic_rotate %99 by %c246_i32_46 dim 1 : vector<8x256xf32>, i32 -> vector<8x256xf32>
    %c245_i32_47 = arith.constant 245 : i32
    %107 = tpu.dynamic_rotate %99 by %c245_i32_47 dim 1 : vector<8x256xf32>, i32 -> vector<8x256xf32>
    %108 = tpu.concatenate %100, %101, %102, %103, %99, %104, %105, %106, %107 in 0 : vector<8x256xf32>, vector<8x256xf32>, vector<8x256xf32>, vector<8x256xf32>, vector<8x256xf32>, vector<8x256xf32>, vector<8x256xf32>, vector<8x256xf32>, vector<8x256xf32> -> vector<72x256xf32>
    %109 = arith.truncf %108 : vector<72x256xf32> to vector<72x256xbf16>
    %c0_48 = arith.constant 0 : index
    %c0_49 = arith.constant 0 : index
    %110 = vector.load %arg3[%c0_48, %c0_49] : memref<8x72xbf16, #tpu.memory_space<vmem>>, vector<8x72xbf16>
    %cst_50 = arith.constant dense<0.000000e+00> : vector<8x256xf32>
    %111 = tpu.matmul %110, %109, %cst_50 {dimension_numbers = #tpu.dot_dimension_numbers<[1], [0], [0], [1], [0, 0, 1, 1], [], []>} : vector<8x72xbf16>, vector<72x256xbf16>, vector<8x256xf32> -> vector<8x256xf32>
    %112 = vector.broadcast %0 : vector<1x256xf32> to vector<8x256xf32>
    %113 = arith.mulf %111, %112 : vector<8x256xf32>
    %cst_51 = arith.constant dense<0.000000e+00> : vector<8xf32>
    %114 = vector.multi_reduction <add>, %113, %cst_51 [1] : vector<8x256xf32> to vector<8xf32>
    %115 = vector.shape_cast %114 : vector<8xf32> to vector<8x1xf32>
    %116 = arith.mulf %111, %111 : vector<8x256xf32>
    %117 = vector.broadcast %0 : vector<1x256xf32> to vector<8x256xf32>
    %118 = arith.mulf %116, %117 : vector<8x256xf32>
    %cst_52 = arith.constant dense<0.000000e+00> : vector<8xf32>
    %119 = vector.multi_reduction <add>, %118, %cst_52 [1] : vector<8x256xf32> to vector<8xf32>
    %120 = vector.shape_cast %119 : vector<8xf32> to vector<8x1xf32>
    %cst_53 = arith.constant 7.812500e-03 : f32
    %121 = vector.broadcast %cst_53 : f32 to vector<8x1xf32>
    %122 = arith.mulf %115, %121 : vector<8x1xf32>
    %cst_54 = arith.constant 7.812500e-03 : f32
    %123 = vector.broadcast %cst_54 : f32 to vector<8x1xf32>
    %124 = arith.mulf %120, %123 : vector<8x1xf32>
    %125 = arith.mulf %122, %122 : vector<8x1xf32>
    %126 = arith.subf %124, %125 : vector<8x1xf32>
    %cst_55 = arith.constant 0.000000e+00 : f32
    %127 = vector.broadcast %cst_55 : f32 to vector<8x1xf32>
    %128 = arith.maximumf %126, %127 : vector<8x1xf32>
    %129 = vector.broadcast %122 : vector<8x1xf32> to vector<8x256xf32>
    %130 = arith.subf %111, %129 : vector<8x256xf32>
    %cst_56 = arith.constant 9.99999974E-6 : f32
    %131 = vector.broadcast %cst_56 : f32 to vector<8x1xf32>
    %132 = arith.addf %128, %131 : vector<8x1xf32>
    %133 = math.rsqrt %132 : vector<8x1xf32>
    %134 = vector.broadcast %133 : vector<8x1xf32> to vector<8x256xf32>
    %135 = arith.mulf %130, %134 : vector<8x256xf32>
    %136 = arith.addf %135, %50 : vector<8x256xf32>
    %cst_57 = arith.constant 0.000000e+00 : f32
    %137 = vector.broadcast %cst_57 : f32 to vector<8x256xf32>
    %138 = arith.cmpf oge, %136, %137 : vector<8x256xf32>
    %cst_58 = arith.constant 0.00999999977 : f32
    %139 = vector.broadcast %cst_58 : f32 to vector<8x256xf32>
    %140 = arith.mulf %139, %136 : vector<8x256xf32>
    %141 = arith.select %138, %136, %140 : vector<8x256xi1>, vector<8x256xf32>
    %142 = vector.broadcast %0 : vector<1x256xf32> to vector<8x256xf32>
    %143 = arith.mulf %141, %142 : vector<8x256xf32>
    %c0_59 = arith.constant 0 : index
    %c0_60 = arith.constant 0 : index
    %144 = vector.load %arg9[%c0_59, %c0_60] : memref<8x256xf32, #tpu.memory_space<vmem>>, vector<8x256xf32>
    tpu.vector_store %arg9[%c0_59, %c0_60], %143 {strides = array<i32>} : memref<8x256xf32, #tpu.memory_space<vmem>>, vector<8x256xf32>,
    return
  }
}

</mosaic_0001>

<llo_original>
// kernel: unet_encoder_block.2
$region0: #{unet_encoder_block.2}
  #allocation0 [shape = 'u32[]', space=smem, size = 0x4, offset = 0x4, fixed_abs, tag = 'smem constant byte address 0x4 - core index']
  #allocation1 [shape = 'u32[144,128]{1,0:T(1,128)}', space=vmem, size = 0x12000, scoped, tag = 'internal scratch']
  %s0 = inlined_call_operand.vmem [shape: f32[2,8,2,8,8], index: 0, kind: input, shape index: {}]
  %s1 = inlined_call_operand.vmem [shape: f32[2,8,8,4], index: 1, kind: output, shape index: {}]
  %s2 = sld [smem:[#allocation0]]
  $region14: #{unet_encoder_block.2} parent=0
    _
  %s4 = ssub.s32 1, %s2
  %s5 = scalar_select 0, %s4, %s2
  // Predicated region
  $region2: #{unet_encoder_block.2} parent=0 // pred_check
    _
  $region3: #{unet_encoder_block.2} parent=0 // pred_check_branch
    %7 = sbr.rel (0) target = $region5
  $region4: #{unet_encoder_block.2} parent=0 // pred_region
    _
  $region5: #{unet_encoder_block.2} parent=0 // pred_fallthru
    _
  %v8 = vld [vmem:[%s0] sm:$0xff]
  %v9 = vld [vmem:[%s0 + $0x8] sm:$0xff]
  %v10 = vld [vmem:[%s0 + $0x10] sm:$0xff]
  %v11 = vld [vmem:[%s0 + $0x18] sm:$0xff]
  %v12 = vld [vmem:[%s0 + $0x20] sm:$0xff]
  %v13 = vld [vmem:[%s0 + $0x28] sm:$0xff]
  %v14 = vld [vmem:[%s0 + $0x30] sm:$0xff]
  %v15 = vld [vmem:[%s0 + $0x38] sm:$0xff]
  %v16 = vld [vmem:[%s0 + $0x40] sm:$0xff]
  %v17 = vld [vmem:[%s0 + $0x48] sm:$0xff]
  %v18 = vld [vmem:[%s0 + $0x50] sm:$0xff]
  %v19 = vld [vmem:[%s0 + $0x58] sm:$0xff]
  %v20 = vld [vmem:[%s0 + $0x60] sm:$0xff]
  %v21 = vld [vmem:[%s0 + $0x68] sm:$0xff]
  %v22 = vld [vmem:[%s0 + $0x70] sm:$0xff]
  %v23 = vld [vmem:[%s0 + $0x78] sm:$0xff]
  %v24 = vld [vmem:[%s0 + $0x80] sm:$0xff]
  %v25 = vld [vmem:[%s0 + $0x88] sm:$0xff]
  %v26 = vld [vmem:[%s0 + $0x90] sm:$0xff]
  %v27 = vld [vmem:[%s0 + $0x98] sm:$0xff]
  %v28 = vld [vmem:[%s0 + $0xa0] sm:$0xff]
  %v29 = vld [vmem:[%s0 + $0xa8] sm:$0xff]
  %v30 = vld [vmem:[%s0 + $0xb0] sm:$0xff]
  %v31 = vld [vmem:[%s0 + $0xb8] sm:$0xff]
  %v32 = vld [vmem:[%s0 + $0xc0] sm:$0xff]
  %v33 = vld [vmem:[%s0 + $0xc8] sm:$0xff]
  %v34 = vld [vmem:[%s0 + $0xd0] sm:$0xff]
  %v35 = vld [vmem:[%s0 + $0xd8] sm:$0xff]
  %v36 = vld [vmem:[%s0 + $0xe0] sm:$0xff]
  %v37 = vld [vmem:[%s0 + $0xe8] sm:$0xff]
  %v38 = vld [vmem:[%s0 + $0xf0] sm:$0xff]
  %v39 = vld [vmem:[%s0 + $0xf8] sm:$0xff]
  %v40 = vmax.f32 %v8, %v9
  %v41 = vmax.f32 %v10, %v11
  %v42 = vmax.f32 %v12, %v13
  %v43 = vmax.f32 %v14, %v15
  %v44 = vmax.f32 %v16, %v17
  %v45 = vmax.f32 %v18, %v19
  %v46 = vmax.f32 %v20, %v21
  %v47 = vmax.f32 %v22, %v23
  %v48 = vmax.f32 %v24, %v25
  %v49 = vmax.f32 %v26, %v27
  %v50 = vmax.f32 %v28, %v29
  %v51 = vmax.f32 %v30, %v31
  %v52 = vmax.f32 %v32, %v33
  %v53 = vmax.f32 %v34, %v35
  %v54 = vmax.f32 %v36, %v37
  %v55 = vmax.f32 %v38, %v39
  %72 = vrot.lane.b32.xlu0 %v40, 124
  %v73 = vpop.permute.xlu0 %72
  %74 = vrot.lane.b32.xlu0 %v41, 124
  %v75 = vpop.permute.xlu0 %74
  %76 = vrot.lane.b32.xlu0 %v42, 124
  %v77 = vpop.permute.xlu0 %76
  %78 = vrot.lane.b32.xlu0 %v43, 124
  %v79 = vpop.permute.xlu0 %78
  %80 = vrot.lane.b32.xlu0 %v44, 124
  %v81 = vpop.permute.xlu0 %80
  %82 = vrot.lane.b32.xlu0 %v45, 124
  %v83 = vpop.permute.xlu0 %82
  %84 = vrot.lane.b32.xlu0 %v46, 124
  %v85 = vpop.permute.xlu0 %84
  %86 = vrot.lane.b32.xlu0 %v47, 124
  %v87 = vpop.permute.xlu0 %86
  %88 = vrot.lane.b32.xlu0 %v48, 124
  %v89 = vpop.permute.xlu0 %88
  %90 = vrot.lane.b32.xlu0 %v49, 124
  %v91 = vpop.permute.xlu0 %90
  %92 = vrot.lane.b32.xlu0 %v50, 124
  %v93 = vpop.permute.xlu0 %92
  %94 = vrot.lane.b32.xlu0 %v51, 124
  %v95 = vpop.permute.xlu0 %94
  %96 = vrot.lane.b32.xlu0 %v52, 124
  %v97 = vpop.permute.xlu0 %96
  %98 = vrot.lane.b32.xlu0 %v53, 124
  %v99 = vpop.permute.xlu0 %98
  %100 = vrot.lane.b32.xlu0 %v54, 124
  %v101 = vpop.permute.xlu0 %100
  %102 = vrot.lane.b32.xlu0 %v55, 124
  %v103 = vpop.permute.xlu0 %102
  %v120 = vmax.f32 %v40, %v73
  %v121 = vmax.f32 %v41, %v75
  %v122 = vmax.f32 %v42, %v77
  %v123 = vmax.f32 %v43, %v79
  %v124 = vmax.f32 %v44, %v81
  %v125 = vmax.f32 %v45, %v83
  %v126 = vmax.f32 %v46, %v85
  %v127 = vmax.f32 %v47, %v87
  %v128 = vmax.f32 %v48, %v89
  %v129 = vmax.f32 %v49, %v91
  %v130 = vmax.f32 %v50, %v93
  %v131 = vmax.f32 %v51, %v95
  %v132 = vmax.f32 %v52, %v97
  %v133 = vmax.f32 %v53, %v99
  %v134 = vmax.f32 %v54, %v101
  %v135 = vmax.f32 %v55, %v103
  %vm136 = vcmask 31744
  %137 = vst.msk [vmem:[%s1] sm:$0xff] %vm136, %v120
  %138 = vst.msk [vmem:[%s1 + $0x8] sm:$0xff] %vm136, %v121
  %139 = vst.msk [vmem:[%s1 + $0x10] sm:$0xff] %vm136, %v122
  %140 = vst.msk [vmem:[%s1 + $0x18] sm:$0xff] %vm136, %v123
  %141 = vst.msk [vmem:[%s1 + $0x20] sm:$0xff] %vm136, %v124
  %142 = vst.msk [vmem:[%s1 + $0x28] sm:$0xff] %vm136, %v125
  %143 = vst.msk [vmem:[%s1 + $0x30] sm:$0xff] %vm136, %v126
  %144 = vst.msk [vmem:[%s1 + $0x38] sm:$0xff] %vm136, %v127
  %145 = vst.msk [vmem:[%s1 + $0x40] sm:$0xff] %vm136, %v128
  %146 = vst.msk [vmem:[%s1 + $0x48] sm:$0xff] %vm136, %v129
  %147 = vst.msk [vmem:[%s1 + $0x50] sm:$0xff] %vm136, %v130
  %148 = vst.msk [vmem:[%s1 + $0x58] sm:$0xff] %vm136, %v131
  %149 = vst.msk [vmem:[%s1 + $0x60] sm:$0xff] %vm136, %v132
  %150 = vst.msk [vmem:[%s1 + $0x68] sm:$0xff] %vm136, %v133
  %151 = vst.msk [vmem:[%s1 + $0x70] sm:$0xff] %vm136, %v134
  %152 = vst.msk [vmem:[%s1 + $0x78] sm:$0xff] %vm136, %v135
  // Predicated region
  $region6: #{unet_encoder_block.2} parent=0 // pred_check
    _
  $region7: #{unet_encoder_block.2} parent=0 // pred_check_branch
    %154 = sbr.rel (0) target = $region9
  $region8: #{unet_encoder_block.2} parent=0 // pred_region
    _
  $region9: #{unet_encoder_block.2} parent=0 // pred_fallthru
    _
  // Predicated region
  $region10: #{unet_encoder_block.2} parent=0 // pred_check
    _
  $region11: #{unet_encoder_block.2} parent=0 // pred_check_branch
    %156 = sbr.rel (0) target = $region13
  $region12: #{unet_encoder_block.2} parent=0 // pred_region
    _
  $region13: #{unet_encoder_block.2} parent=0 // pred_fallthru
    _

// kernel: unet_encoder_block.3
$region0: #{unet_encoder_block.3}
  #allocation0 [shape = 'u32[]', space=smem, size = 0x4, offset = 0x4, fixed_abs, tag = 'smem constant byte address 0x4 - core index']
  #allocation1 [shape = 'u32[144,128]{1,0:T(1,128)}', space=vmem, size = 0x12000, scoped, tag = 'internal scratch']
  %s0 = inlined_call_operand.vmem [shape: f32[8,256], index: 0, kind: input, shape index: {}]
  %s1 = inlined_call_operand.vmem [shape: bf16[8,72], index: 1, kind: input, shape index: {}]
  %s2 = inlined_call_operand.vmem [shape: bf16[8,72], index: 2, kind: input, shape index: {}]
  %s3 = inlined_call_operand.vmem [shape: bf16[8,72], index: 3, kind: input, shape index: {}]
  %s4 = inlined_call_operand.vmem [shape: f32[8,1], index: 4, kind: input, shape index: {}]
  %s5 = inlined_call_operand.vmem [shape: f32[8,1], index: 5, kind: input, shape index: {}]
  %s6 = inlined_call_operand.vmem [shape: f32[8,1], index: 6, kind: input, shape index: {}]
  %s7 = inlined_call_operand.vmem [shape: f32[8,1], index: 7, kind: input, shape index: {}]
  %s8 = inlined_call_operand.vmem [shape: f32[1,256], index: 8, kind: input, shape index: {}]
  %s9 = inlined_call_operand.vmem [shape: f32[8,256], index: 9, kind: output, shape index: {}]
  %s10 = sld [smem:[#allocation0]]
  $region46: #{unet_encoder_block.3} parent=0
    _
  %s12 = ssub.s32 1, %s10
  %s13 = scalar_select 0, %s12, %s10
  // Predicated region
  $region2: #{unet_encoder_block.3} parent=0 // pred_check
    _
  $region3: #{unet_encoder_block.3} parent=0 // pred_check_branch
    %15 = sbr.rel (0) target = $region5
  $region4: #{unet_encoder_block.3} parent=0 // pred_region
    _
  $region5: #{unet_encoder_block.3} parent=0 // pred_fallthru
    _
  // Predicated region
  $region6: #{unet_encoder_block.3} parent=0 // pred_check
    _
  $region7: #{unet_encoder_block.3} parent=0 // pred_check_branch
    %17 = sbr.rel (0) target = $region9
  $region8: #{unet_encoder_block.3} parent=0 // pred_region
    _
  $region9: #{unet_encoder_block.3} parent=0 // pred_fallthru
    _
  // Predicated region
  $region10: #{unet_encoder_block.3} parent=0 // pred_check
    _
  $region11: #{unet_encoder_block.3} parent=0 // pred_check_branch
    %19 = sbr.rel (0) target = $region13
  $region12: #{unet_encoder_block.3} parent=0 // pred_region
    _
  $region13: #{unet_encoder_block.3} parent=0 // pred_fallthru
    _
  // Predicated region
  $region14: #{unet_encoder_block.3} parent=0 // pred_check
    _
  $region15: #{unet_encoder_block.3} parent=0 // pred_check_branch
    %21 = sbr.rel (0) target = $region17
  $region16: #{unet_encoder_block.3} parent=0 // pred_region
    _
  $region17: #{unet_encoder_block.3} parent=0 // pred_fallthru
    _
  // Predicated region
  $region18: #{unet_encoder_block.3} parent=0 // pred_check
    _
  $region19: #{unet_encoder_block.3} parent=0 // pred_check_branch
    %23 = sbr.rel (0) target = $region21
  $region20: #{unet_encoder_block.3} parent=0 // pred_region
    _
  $region21: #{unet_encoder_block.3} parent=0 // pred_fallthru
    _
  // Predicated region
  $region22: #{unet_encoder_block.3} parent=0 // pred_check
    _
  $region23: #{unet_encoder_block.3} parent=0 // pred_check_branch
    %25 = sbr.rel (0) target = $region25
  $region24: #{unet_encoder_block.3} parent=0 // pred_region
    _
  $region25: #{unet_encoder_block.3} parent=0 // pred_fallthru
    _
  // Predicated region
  $region26: #{unet_encoder_block.3} parent=0 // pred_check
    _
  $region27: #{unet_encoder_block.3} parent=0 // pred_check_branch
    %27 = sbr.rel (0) target = $region29
  $region28: #{unet_encoder_block.3} parent=0 // pred_region
    _
  $region29: #{unet_encoder_block.3} parent=0 // pred_fallthru
    _
  // Predicated region
  $region30: #{unet_encoder_block.3} parent=0 // pred_check
    _
  $region31: #{unet_encoder_block.3} parent=0 // pred_check_branch
    %29 = sbr.rel (0) target = $region33
  $region32: #{unet_encoder_block.3} parent=0 // pred_region
    _
  $region33: #{unet_encoder_block.3} parent=0 // pred_fallthru
    _
  // Predicated region
  $region34: #{unet_encoder_block.3} parent=0 // pred_check
    _
  $region35: #{unet_encoder_block.3} parent=0 // pred_check_branch
    %31 = sbr.rel (0) target = $region37
  $region36: #{unet_encoder_block.3} parent=0 // pred_region
    _
  $region37: #{unet_encoder_block.3} parent=0 // pred_fallthru
    _
  %v33 = vld [vmem:[%s8] sm:$0x3]
  %v34 = vld [vmem:[%s0] sm:$0xff]
  %v35 = vld [vmem:[%s0 + $0x8] sm:$0xff]
  %36 = vrot.lane.b32.xlu0 %v34, 11
  %v37 = vpop.permute.xlu0 %36
  %38 = vrot.lane.b32.xlu0 %v35, 11
  %v39 = vpop.permute.xlu0 %38
  %v40 = vlaneseq
  %v41 = vand.u32 %v40, 127
  %vm42 = vcmp.lt.s32.totalorder %v41, 11
  %v43 = vsel %vm42, %v37, %v39
  %v44 = vsel %vm42, %v39, %v37
  %45 = vrot.lane.b32.xlu0 %v34, 10
  %v46 = vpop.permute.xlu0 %45
  %47 = vrot.lane.b32.xlu0 %v35, 10
  %v48 = vpop.permute.xlu0 %47
  %vm49 = vcmp.lt.s32.totalorder %v41, 10
  %v50 = vsel %vm49, %v46, %v48
  %v51 = vsel %vm49, %v48, %v46
  %52 = vrot.lane.b32.xlu0 %v34, 9
  %v53 = vpop.permute.xlu0 %52
  %54 = vrot.lane.b32.xlu0 %v35, 9
  %v55 = vpop.permute.xlu0 %54
  %vm56 = vcmp.lt.s32.totalorder %v41, 9
  %v57 = vsel %vm56, %v53, %v55
  %v58 = vsel %vm56, %v55, %v53
  %59 = vrot.lane.b32.xlu0 %v34, 1
  %v60 = vpop.permute.xlu0 %59
  %61 = vrot.lane.b32.xlu0 %v35, 1
  %v62 = vpop.permute.xlu0 %61
  %vm63 = vcmp.lt.s32.totalorder %v41, 1
  %v64 = vsel %vm63, %v60, %v62
  %v65 = vsel %vm63, %v62, %v60
  %66 = vrot.lane.b32.xlu0 %v34, 127
  %v67 = vpop.permute.xlu0 %66
  %68 = vrot.lane.b32.xlu0 %v35, 127
  %v69 = vpop.permute.xlu0 %68
  %vm70 = vcmp.lt.s32.totalorder %v41, 127
  %v71 = vsel %vm70, %v67, %v69
  %v72 = vsel %vm70, %v69, %v67
  %73 = vrot.lane.b32.xlu0 %v34, 119
  %v74 = vpop.permute.xlu0 %73
  %75 = vrot.lane.b32.xlu0 %v35, 119
  %v76 = vpop.permute.xlu0 %75
  %vm77 = vcmp.lt.s32.totalorder %v41, 119
  %v78 = vsel %vm77, %v74, %v76
  %v79 = vsel %vm77, %v76, %v74
  %80 = vrot.lane.b32.xlu0 %v34, 118
  %v81 = vpop.permute.xlu0 %80
  %82 = vrot.lane.b32.xlu0 %v35, 118
  %v83 = vpop.permute.xlu0 %82
  %vm84 = vcmp.lt.s32.totalorder %v41, 118
  %v85 = vsel %vm84, %v81, %v83
  %v86 = vsel %vm84, %v83, %v81
  %87 = vrot.lane.b32.xlu0 %v34, 117
  %v88 = vpop.permute.xlu0 %87
  %89 = vrot.lane.b32.xlu0 %v35, 117
  %v90 = vpop.permute.xlu0 %89
  %vm91 = vcmp.lt.s32.totalorder %v41, 117
  %v92 = vsel %vm91, %v88, %v90
  %v93 = vsel %vm91, %v90, %v88
  %v94 = vpack.c.bf16 %v51, %v44
  %v95 = vpack.c.bf16 %v50, %v43
  %v96 = vpack.c.bf16 %v65, %v58
  %v97 = vpack.c.bf16 %v64, %v57
  %v98 = vpack.c.bf16 %v71, %v34
  %v99 = vpack.c.bf16 %v72, %v35
  %v100 = vpack.c.bf16 %v85, %v78
  %v101 = vpack.c.bf16 %v86, %v79
  %v102 = vpack.c.bf16 %v92, %v92
  %v103 = vpack.c.bf16 %v93, %v93
  %v104 = vld [vmem:[%s1] sm:$0xf]
  %vm105 = vcmask 588800
  %v107 = vsel %vm105, %v104, 0
  %vm109 = vcmask 1043456
  %v111 = vsel %vm109, %v102, 0
  %v114 = vsel %vm109, %v103, 0
  %116 = vmatprep.subr.bf16.mxu0 0
  %117 = vmatpush1.bf16.msra.mxu0 0
  %118 = vmatprep.subr.bf16.mxu0 0
  %119 = vmatpush1.bf16.msra.mxu0 0
  %120 = vmatprep.subr.bf16.mxu0 0
  %121 = vmatpush1.bf16.msra.mxu0 0
  %122 = vmatprep.subr.bf16.mxu0 %v114
  %123 = vmatpush1.bf16.msra.mxu0 %v111
  %124 = vmatprep.subr.bf16.mxu0 %v101
  %125 = vmatpush1.bf16.msra.mxu0 %v100
  %126 = vmatprep.subr.bf16.mxu0 %v99
  %127 = vmatpush1.bf16.msra.mxu0 %v98
  %128 = vmatprep.subr.bf16.mxu0 %v97
  %129 = vmatpush1.bf16.msra.mxu0 %v96
  %130 = vmatprep.subr.bf16.mxu0 %v95
  %131 = vmatpush1.bf16.msra.mxu0 %v94
  %132 = vmatprep.subr.bf16.mxu0 0
  %133 = vmatpush2.bf16.msra.mxu0 0
  %134 = vmatprep.subr.bf16.mxu0 0
  %135 = vmatpush2.bf16.msra.mxu0 0
  %136 = vmatprep.subr.bf16.mxu0 0
  %137 = vmatpush2.bf16.msra.mxu0 0
  %138 = vmatprep.subr.bf16.mxu0 0
  %139 = vmatpush2.bf16.msra.mxu0 0
  %140 = vmatprep.subr.bf16.mxu0 0
  %141 = vmatpush2.bf16.msra.mxu0 0
  %142 = vmatprep.subr.bf16.mxu0 0
  %143 = vmatpush2.bf16.msra.mxu0 0
  %144 = vmatprep.subr.bf16.mxu0 0
  %145 = vmatpush2.bf16.msra.mxu0 0
  %146 = vmatprep.subr.bf16.mxu0 0
  %147 = vmatpush2.bf16.msra.mxu0 0
  %148 = vmatprep.mubr.bf16.mxu0 0
  %149 = vmatmul.mubr.bf16.gmra.mxu0 %v107
  %v150 = vpop.f32.mrf.mxu0
  %v151 = vadd.f32 0.0, %v150
  %v152 = vpop.f32.mrf.mxu0
  %v153 = vadd.f32 0.0, %v152
  %v154 = vpop.f32.mrf.mxu0
  %v155 = vpop.f32.mrf.mxu0
  %156 = vdwg.mxu0
  %v158 = vlaneseq
  %v159 = vshrl.u32 %v158, 7
  %v160 = vsub.s32 0, %v159
  %v161 = vrot.slane %v33, %v160
  %v162 = vlaneseq
  %v163 = vshrl.u32 %v162, 7
  %v164 = vsub.s32 1, %v163
  %v165 = vrot.slane %v33, %v164
  %v168 = vmul.f32 %v151, %v161
  %v169 = vmul.f32 %v153, %v165
  %v170 = vadd.f32 %v168, %v169
  %171 = vadd.xlane.f32.xlu0 %v170
  %v172 = vpop.xlane.xlu0 %171
  %v173 = vmul.f32 %v151, %v151
  %v174 = vmul.f32 %v153, %v153
  %v175 = vmul.f32 %v173, %v161
  %v176 = vmul.f32 %v174, %v165
  %v177 = vadd.f32 %v175, %v176
  %178 = vadd.xlane.f32.xlu0 %v177
  %v179 = vpop.xlane.xlu0 %178
  %v180 = vmul.f32 %v172, 0.0078125
  %v181 = vmul.f32 %v179, 0.0078125
  %v182 = vmul.f32 %v180, %v180
  %v183 = vsub.f32 %v181, %v182
  %v184 = vmax.f32 %v183, 0.0
  %v185 = vsub.f32 %v151, %v180
  %v186 = vsub.f32 %v153, %v180
  %v187 = vadd.f32 %v184, 0.0001
  %v188 = vrsqrt.pop %v187
  %v189 = vmul.f32 %v185, %v188
  %v190 = vmul.f32 %v186, %v188
  %v191 = vld [vmem:[%s4] sm:$0xff]
  %193 = vset.pattern.permute.xlu0 0
  %194 = vperm.xlu0 %193, %v191
  %v195 = vpop.permute.xlu0 %194
  %v197 = vmul.f32 %v189, %v195
  %v198 = vmul.f32 %v190, %v195
  %v199 = vld [vmem:[%s5] sm:$0xff]
  %201 = vset.pattern.permute.xlu0 0
  %202 = vperm.xlu0 %201, %v199
  %v203 = vpop.permute.xlu0 %202
  %v205 = vadd.f32 %v197, %v203
  %v206 = vadd.f32 %v198, %v203
  %vm207 = vcmp.ge.f32.partialorder %v205, 0.0
  %vm208 = vcmp.ge.f32.partialorder %v206, 0.0
  %v209 = vmul.f32 %v205, 0.333
  %v210 = vmul.f32 %v206, 0.333
  %v211 = vsel %vm207, %v205, %v209
  %v212 = vsel %vm208, %v206, %v210
  %v213 = vmul.f32 %v211, %v161
  %v214 = vmul.f32 %v212, %v165
  %215 = vrot.lane.b32.xlu0 %v213, 11
  %v216 = vpop.permute.xlu0 %215
  %217 = vrot.lane.b32.xlu0 %v214, 11
  %v218 = vpop.permute.xlu0 %217
  %v219 = vsel %vm42, %v216, %v218
  %v220 = vsel %vm42, %v218, %v216
  %221 = vrot.lane.b32.xlu0 %v213, 10
  %v222 = vpop.permute.xlu0 %221
  %223 = vrot.lane.b32.xlu0 %v214, 10
  %v224 = vpop.permute.xlu0 %223
  %v225 = vsel %vm49, %v222, %v224
  %v226 = vsel %vm49, %v224, %v222
  %227 = vrot.lane.b32.xlu0 %v213, 9
  %v228 = vpop.permute.xlu0 %227
  %229 = vrot.lane.b32.xlu0 %v214, 9
  %v230 = vpop.permute.xlu0 %229
  %v231 = vsel %vm56, %v228, %v230
  %v232 = vsel %vm56, %v230, %v228
  %233 = vrot.lane.b32.xlu0 %v213, 1
  %v234 = vpop.permute.xlu0 %233
  %235 = vrot.lane.b32.xlu0 %v214, 1
  %v236 = vpop.permute.xlu0 %235
  %v237 = vsel %vm63, %v234, %v236
  %v238 = vsel %vm63, %v236, %v234
  %239 = vrot.lane.b32.xlu0 %v213, 127
  %v240 = vpop.permute.xlu0 %239
  %241 = vrot.lane.b32.xlu0 %v214, 127
  %v242 = vpop.permute.xlu0 %241
  %v243 = vsel %vm70, %v240, %v242
  %v244 = vsel %vm70, %v242, %v240
  %245 = vrot.lane.b32.xlu0 %v213, 119
  %v246 = vpop.permute.xlu0 %245
  %247 = vrot.lane.b32.xlu0 %v214, 119
  %v248 = vpop.permute.xlu0 %247
  %v249 = vsel %vm77, %v246, %v248
  %v250 = vsel %vm77, %v248, %v246
  %251 = vrot.lane.b32.xlu0 %v213, 118
  %v252 = vpop.permute.xlu0 %251
  %253 = vrot.lane.b32.xlu0 %v214, 118
  %v254 = vpop.permute.xlu0 %253
  %v255 = vsel %vm84, %v252, %v254
  %v256 = vsel %vm84, %v254, %v252
  %257 = vrot.lane.b32.xlu0 %v213, 117
  %v258 = vpop.permute.xlu0 %257
  %259 = vrot.lane.b32.xlu0 %v214, 117
  %v260 = vpop.permute.xlu0 %259
  %v261 = vsel %vm91, %v258, %v260
  %v262 = vsel %vm91, %v260, %v258
  %v263 = vpack.c.bf16 %v226, %v220
  %v264 = vpack.c.bf16 %v225, %v219
  %v265 = vpack.c.bf16 %v238, %v232
  %v266 = vpack.c.bf16 %v237, %v231
  %v267 = vpack.c.bf16 %v243, %v213
  %v268 = vpack.c.bf16 %v244, %v214
  %v269 = vpack.c.bf16 %v255, %v249
  %v270 = vpack.c.bf16 %v256, %v250
  %v271 = vpack.c.bf16 %v261, %v261
  %v272 = vpack.c.bf16 %v262, %v262
  %v273 = vld [vmem:[%s2] sm:$0xf]
  %v275 = vsel %vm105, %v273, 0
  %v278 = vsel %vm109, %v271, 0
  %v281 = vsel %vm109, %v272, 0
  %283 = vmatprep.subr.bf16.mxu0 0
  %284 = vmatpush1.bf16.msra.mxu0 0
  %285 = vmatprep.subr.bf16.mxu0 0
  %286 = vmatpush1.bf16.msra.mxu0 0
  %287 = vmatprep.subr.bf16.mxu0 0
  %288 = vmatpush1.bf16.msra.mxu0 0
  %289 = vmatprep.subr.bf16.mxu0 %v281
  %290 = vmatpush1.bf16.msra.mxu0 %v278
  %291 = vmatprep.subr.bf16.mxu0 %v270
  %292 = vmatpush1.bf16.msra.mxu0 %v269
  %293 = vmatprep.subr.bf16.mxu0 %v268
  %294 = vmatpush1.bf16.msra.mxu0 %v267
  %295 = vmatprep.subr.bf16.mxu0 %v266
  %296 = vmatpush1.bf16.msra.mxu0 %v265
  %297 = vmatprep.subr.bf16.mxu0 %v264
  %298 = vmatpush1.bf16.msra.mxu0 %v263
  %299 = vmatprep.subr.bf16.mxu0 0
  %300 = vmatpush2.bf16.msra.mxu0 0
  %301 = vmatprep.subr.bf16.mxu0 0
  %302 = vmatpush2.bf16.msra.mxu0 0
  %303 = vmatprep.subr.bf16.mxu0 0
  %304 = vmatpush2.bf16.msra.mxu0 0
  %305 = vmatprep.subr.bf16.mxu0 0
  %306 = vmatpush2.bf16.msra.mxu0 0
  %307 = vmatprep.subr.bf16.mxu0 0
  %308 = vmatpush2.bf16.msra.mxu0 0
  %309 = vmatprep.subr.bf16.mxu0 0
  %310 = vmatpush2.bf16.msra.mxu0 0
  %311 = vmatprep.subr.bf16.mxu0 0
  %312 = vmatpush2.bf16.msra.mxu0 0
  %313 = vmatprep.subr.bf16.mxu0 0
  %314 = vmatpush2.bf16.msra.mxu0 0
  %315 = vmatprep.mubr.bf16.mxu0 0
  %316 = vmatmul.mubr.bf16.gmra.mxu0 %v275
  %v317 = vpop.f32.mrf.mxu0
  %v318 = vadd.f32 0.0, %v317
  %v319 = vpop.f32.mrf.mxu0
  %v320 = vadd.f32 0.0, %v319
  %v321 = vpop.f32.mrf.mxu0
  %v322 = vpop.f32.mrf.mxu0
  %323 = vdwg.mxu0
  %v324 = vmul.f32 %v318, %v161
  %v325 = vmul.f32 %v320, %v165
  %v326 = vadd.f32 %v324, %v325
  %327 = vadd.xlane.f32.xlu0 %v326
  %v328 = vpop.xlane.xlu0 %327
  %v329 = vmul.f32 %v318, %v318
  %v330 = vmul.f32 %v320, %v320
  %v331 = vmul.f32 %v329, %v161
  %v332 = vmul.f32 %v330, %v165
  %v333 = vadd.f32 %v331, %v332
  %334 = vadd.xlane.f32.xlu0 %v333
  %v335 = vpop.xlane.xlu0 %334
  %v336 = vmul.f32 %v328, 0.0078125
  %v337 = vmul.f32 %v335, 0.0078125
  %v338 = vmul.f32 %v336, %v336
  %v339 = vsub.f32 %v337, %v338
  %v340 = vmax.f32 %v339, 0.0
  %v341 = vsub.f32 %v318, %v336
  %v342 = vsub.f32 %v320, %v336
  %v343 = vadd.f32 %v340, 0.0001
  %v344 = vrsqrt.pop %v343
  %v345 = vmul.f32 %v341, %v344
  %v346 = vmul.f32 %v342, %v344
  %v347 = vld [vmem:[%s6] sm:$0xff]
  %349 = vset.pattern.permute.xlu0 0
  %350 = vperm.xlu0 %349, %v347
  %v351 = vpop.permute.xlu0 %350
  %v353 = vmul.f32 %v345, %v351
  %v354 = vmul.f32 %v346, %v351
  %v355 = vld [vmem:[%s7] sm:$0xff]
  %357 = vset.pattern.permute.xlu0 0
  %358 = vperm.xlu0 %357, %v355
  %v359 = vpop.permute.xlu0 %358
  %v361 = vadd.f32 %v353, %v359
  %v362 = vadd.f32 %v354, %v359
  %vm363 = vcmp.ge.f32.partialorder %v361, 0.0
  %vm364 = vcmp.ge.f32.partialorder %v362, 0.0
  %v365 = vmul.f32 %v361, 0.333
  %v366 = vmul.f32 %v362, 0.333
  %v367 = vsel %vm363, %v361, %v365
  %v368 = vsel %vm364, %v362, %v366
  %v369 = vmul.f32 %v367, %v161
  %v370 = vmul.f32 %v368, %v165
  %371 = vrot.lane.b32.xlu0 %v369, 11
  %v372 = vpop.permute.xlu0 %371
  %373 = vrot.lane.b32.xlu0 %v370, 11
  %v374 = vpop.permute.xlu0 %373
  %v375 = vsel %vm42, %v372, %v374
  %v376 = vsel %vm42, %v374, %v372
  %377 = vrot.lane.b32.xlu0 %v369, 10
  %v378 = vpop.permute.xlu0 %377
  %379 = vrot.lane.b32.xlu0 %v370, 10
  %v380 = vpop.permute.xlu0 %379
  %v381 = vsel %vm49, %v378, %v380
  %v382 = vsel %vm49, %v380, %v378
  %383 = vrot.lane.b32.xlu0 %v369, 9
  %v384 = vpop.permute.xlu0 %383
  %385 = vrot.lane.b32.xlu0 %v370, 9
  %v386 = vpop.permute.xlu0 %385
  %v387 = vsel %vm56, %v384, %v386
  %v388 = vsel %vm56, %v386, %v384
  %389 = vrot.lane.b32.xlu0 %v369, 1
  %v390 = vpop.permute.xlu0 %389
  %391 = vrot.lane.b32.xlu0 %v370, 1
  %v392 = vpop.permute.xlu0 %391
  %v393 = vsel %vm63, %v390, %v392
  %v394 = vsel %vm63, %v392, %v390
  %395 = vrot.lane.b32.xlu0 %v369, 127
  %v396 = vpop.permute.xlu0 %395
  %397 = vrot.lane.b32.xlu0 %v370, 127
  %v398 = vpop.permute.xlu0 %397
  %v399 = vsel %vm70, %v396, %v398
  %v400 = vsel %vm70, %v398, %v396
  %401 = vrot.lane.b32.xlu0 %v369, 119
  %v402 = vpop.permute.xlu0 %401
  %403 = vrot.lane.b32.xlu0 %v370, 119
  %v404 = vpop.permute.xlu0 %403
  %v405 = vsel %vm77, %v402, %v404
  %v406 = vsel %vm77, %v404, %v402
  %407 = vrot.lane.b32.xlu0 %v369, 118
  %v408 = vpop.permute.xlu0 %407
  %409 = vrot.lane.b32.xlu0 %v370, 118
  %v410 = vpop.permute.xlu0 %409
  %v411 = vsel %vm84, %v408, %v410
  %v412 = vsel %vm84, %v410, %v408
  %413 = vrot.lane.b32.xlu0 %v369, 117
  %v414 = vpop.permute.xlu0 %413
  %415 = vrot.lane.b32.xlu0 %v370, 117
  %v416 = vpop.permute.xlu0 %415
  %v417 = vsel %vm91, %v414, %v416
  %v418 = vsel %vm91, %v416, %v414
  %v419 = vpack.c.bf16 %v382, %v376
  %v420 = vpack.c.bf16 %v381, %v375
  %v421 = vpack.c.bf16 %v394, %v388
  %v422 = vpack.c.bf16 %v393, %v387
  %v423 = vpack.c.bf16 %v399, %v369
  %v424 = vpack.c.bf16 %v400, %v370
  %v425 = vpack.c.bf16 %v411, %v405
  %v426 = vpack.c.bf16 %v412, %v406
  %v427 = vpack.c.bf16 %v417, %v417
  %v428 = vpack.c.bf16 %v418, %v418
  %v429 = vld [vmem:[%s3] sm:$0xf]
  %v431 = vsel %vm105, %v429, 0
  %v434 = vsel %vm109, %v427, 0
  %v437 = vsel %vm109, %v428, 0
  %439 = vmatprep.subr.bf16.mxu0 0
  %440 = vmatpush1.bf16.msra.mxu0 0
  %441 = vmatprep.subr.bf16.mxu0 0
  %442 = vmatpush1.bf16.msra.mxu0 0
  %443 = vmatprep.subr.bf16.mxu0 0
  %444 = vmatpush1.bf16.msra.mxu0 0
  %445 = vmatprep.subr.bf16.mxu0 %v437
  %446 = vmatpush1.bf16.msra.mxu0 %v434
  %447 = vmatprep.subr.bf16.mxu0 %v426
  %448 = vmatpush1.bf16.msra.mxu0 %v425
  %449 = vmatprep.subr.bf16.mxu0 %v424
  %450 = vmatpush1.bf16.msra.mxu0 %v423
  %451 = vmatprep.subr.bf16.mxu0 %v422
  %452 = vmatpush1.bf16.msra.mxu0 %v421
  %453 = vmatprep.subr.bf16.mxu0 %v420
  %454 = vmatpush1.bf16.msra.mxu0 %v419
  %455 = vmatprep.subr.bf16.mxu0 0
  %456 = vmatpush2.bf16.msra.mxu0 0
  %457 = vmatprep.subr.bf16.mxu0 0
  %458 = vmatpush2.bf16.msra.mxu0 0
  %459 = vmatprep.subr.bf16.mxu0 0
  %460 = vmatpush2.bf16.msra.mxu0 0
  %461 = vmatprep.subr.bf16.mxu0 0
  %462 = vmatpush2.bf16.msra.mxu0 0
  %463 = vmatprep.subr.bf16.mxu0 0
  %464 = vmatpush2.bf16.msra.mxu0 0
  %465 = vmatprep.subr.bf16.mxu0 0
  %466 = vmatpush2.bf16.msra.mxu0 0
  %467 = vmatprep.subr.bf16.mxu0 0
  %468 = vmatpush2.bf16.msra.mxu0 0
  %469 = vmatprep.subr.bf16.mxu0 0
  %470 = vmatpush2.bf16.msra.mxu0 0
  %471 = vmatprep.mubr.bf16.mxu0 0
  %472 = vmatmul.mubr.bf16.gmra.mxu0 %v431
  %v473 = vpop.f32.mrf.mxu0
  %v474 = vadd.f32 0.0, %v473
  %v475 = vpop.f32.mrf.mxu0
  %v476 = vadd.f32 0.0, %v475
  %v477 = vpop.f32.mrf.mxu0
  %v478 = vpop.f32.mrf.mxu0
  %479 = vdwg.mxu0
  %v480 = vmul.f32 %v474, %v161
  %v481 = vmul.f32 %v476, %v165
  %v482 = vadd.f32 %v480, %v481
  %483 = vadd.xlane.f32.xlu0 %v482
  %v484 = vpop.xlane.xlu0 %483
  %v485 = vmul.f32 %v474, %v474
  %v486 = vmul.f32 %v476, %v476
  %v487 = vmul.f32 %v485, %v161
  %v488 = vmul.f32 %v486, %v165
  %v489 = vadd.f32 %v487, %v488
  %490 = vadd.xlane.f32.xlu0 %v489
  %v491 = vpop.xlane.xlu0 %490
  %v492 = vmul.f32 %v484, 0.0078125
  %v493 = vmul.f32 %v491, 0.0078125
  %v494 = vmul.f32 %v492, %v492
  %v495 = vsub.f32 %v493, %v494
  %v496 = vmax.f32 %v495, 0.0
  %v497 = vsub.f32 %v474, %v492
  %v498 = vsub.f32 %v476, %v492
  %v499 = vadd.f32 %v496, 1e-05
  %v500 = vrsqrt.pop %v499
  %v501 = vmul.f32 %v497, %v500
  %v502 = vmul.f32 %v498, %v500
  %v503 = vadd.f32 %v501, %v213
  %v504 = vadd.f32 %v502, %v214
  %vm505 = vcmp.ge.f32.partialorder %v503, 0.0
  %vm506 = vcmp.ge.f32.partialorder %v504, 0.0
  %v507 = vmul.f32 %v503, 0.01
  %v508 = vmul.f32 %v504, 0.01
  %v509 = vsel %vm505, %v503, %v507
  %v510 = vsel %vm506, %v504, %v508
  %v511 = vmul.f32 %v509, %v161
  %v512 = vmul.f32 %v510, %v165
  %513 = vst [vmem:[%s9] sm:$0xff] %v511
  %514 = vst [vmem:[%s9 + $0x8] sm:$0xff] %v512
  // Predicated region
  $region38: #{unet_encoder_block.3} parent=0 // pred_check
    _
  $region39: #{unet_encoder_block.3} parent=0 // pred_check_branch
    %516 = sbr.rel (0) target = $region41
  $region40: #{unet_encoder_block.3} parent=0 // pred_region
    _
  $region41: #{unet_encoder_block.3} parent=0 // pred_fallthru
    _
  // Predicated region
  $region42: #{unet_encoder_block.3} parent=0 // pred_check
    _
  $region43: #{unet_encoder_block.3} parent=0 // pred_check_branch
    %518 = sbr.rel (0) target = $region45
  $region44: #{unet_encoder_block.3} parent=0 // pred_region
    _
  $region45: #{unet_encoder_block.3} parent=0 // pred_fallthru
    _

</llo_original>
